<compile_context>
chip_gen: v7x
topology: tpu7x:2x2x1
jax: 0.10.0
libtpu: 0.0.40
codegen_flags: <defaults>
</compile_context>

<pallas_src>
import functools

import jax
import jax.numpy as jnp
from jax.experimental import pallas as pl
from jax.experimental.pallas import tpu as pltpu

_EPS = 1e-6  # F.pairwise_distance default eps (added to the difference)


def _contrastive_loss_kernel(x1_ref, x2_ref, label_ref, out_ref, *,
                             margin, batch_size, tile_b, ragged):
    x1 = x1_ref[...].astype(jnp.float32)        # (tile_b, D)
    x2 = x2_ref[...].astype(jnp.float32)        # (tile_b, D)
    lbl = label_ref[...].astype(jnp.float32)    # (tile_b, 1)

    # Row-wise Euclidean distance; pairwise_distance adds eps to the diff.
    diff = x1 - x2 + _EPS
    dist_sq = jnp.sum(diff * diff, axis=-1, keepdims=True)    # (tile_b, 1)
    dist = jnp.sqrt(dist_sq)                                   # EUP; sqrt(0)=0

    hinge = jnp.maximum(margin - dist, 0.0)
    # (1-l)*d^2 + l*h^2  ==  d^2 + l*(h^2 - d^2): one fewer lane-sparse VALU op.
    per_pair = dist_sq + lbl * (hinge * hinge - dist_sq)       # (tile_b, 1)

    # Only the ragged case pays for masking (static Python check at trace time).
    if ragged:
        row = (pl.program_id(0) * tile_b
               + jax.lax.broadcasted_iota(jnp.int32, per_pair.shape, 0))
        # select kills any garbage/NaN coming from the padded block region.
        per_pair = jnp.where(row < batch_size, per_pair, 0.0)

    partial = jnp.sum(per_pair)                                # scalar
    # Lane-dense, (8,128)-aligned per-tile output block; wrapper reads [t,0,0].
    out_ref[...] = jnp.broadcast_to(partial, out_ref.shape)


def _vmem_limit_bytes():
    # Generation-aware scoped-VMEM limit.  Fallback assumes v7x (64 MiB/core),
    # which is the tightest generation, so the fallback is always safe.
    cap = 64 * 1024 * 1024
    try:
        info = pltpu.get_tpu_info()
        cap = int(getattr(info, "vmem_capacity_bytes", cap)) or cap
    except Exception:
        pass
    return max(32 * 1024 * 1024, min(cap * 3 // 4, 96 * 1024 * 1024))


def _pick_tile_b(batch, dim, itemsize, vmem_limit):
    """Largest batch tile whose double-buffered working set fits the budget."""
    # Working set per grid step:
    #   x1 + x2 : 2 inputs x 2 buffers x tile_b x D x itemsize
    #   label   : 2 buffers x tile_b x 512 B   ((tile_b,1) pads to 128 lanes)
    budget = min(vmem_limit - 8 * 1024 * 1024, 40 * 1024 * 1024)
    per_row = 2 * 2 * dim * itemsize + 2 * 128 * 4
    rows = max(8, budget // per_row)
    tile_b = min(8192, (rows // 8) * 8)
    if tile_b >= batch:
        return batch              # single tile: block == full array (always legal)
    return max(8, tile_b)
    # TODO(synk): for very large D (tens of thousands) add a D-axis reduction
    # grid with a (tile_b, 1) partial-dist_sq scratch instead of shrinking tile_b.


def contrastive_loss(output1, output2, label, margin=1.0, tile_b=None):
    """Pallas TPU implementation of ContrastiveLoss.forward.

    output1, output2: (B, D) float arrays (f32 or bf16; bf16 halves HBM bytes).
    label:            (B, 1) float array (0 similar, 1 dissimilar).
    Returns a scalar float32 loss.
    """
    B, D = output1.shape
    assert output2.shape == (B, D)
    label = jnp.reshape(label, (B, 1))

    vmem_limit = _vmem_limit_bytes()
    if tile_b is None:
        tile_b = _pick_tile_b(B, D, jnp.dtype(output1.dtype).itemsize, vmem_limit)
    tile_b = int(min(tile_b, B))
    if tile_b < B and tile_b % 8 != 0:
        tile_b = max(8, (tile_b // 8) * 8)    # sublane (8, .) constraint
    num_tiles = pl.cdiv(B, tile_b)
    ragged = (B % tile_b) != 0

    kernel = functools.partial(
        _contrastive_loss_kernel,
        margin=float(margin), batch_size=B, tile_b=tile_b, ragged=ragged)

    partials = pl.pallas_call(
        kernel,
        out_shape=jax.ShapeDtypeStruct((num_tiles, 8, 128), jnp.float32),
        grid=(num_tiles,),
        in_specs=[
            pl.BlockSpec((tile_b, D), lambda t: (t, 0)),
            pl.BlockSpec((tile_b, D), lambda t: (t, 0)),
            pl.BlockSpec((tile_b, 1), lambda t: (t, 0)),
        ],
        out_specs=pl.BlockSpec((1, 8, 128), lambda t: (t, 0, 0)),
        compiler_params=pltpu.CompilerParams(
            # Carry-free grid -> shardable across TensorCores (v7x megacore).
            dimension_semantics=("parallel",),
            vmem_limit_bytes=vmem_limit,
        ),
    )(output1, output2, label)

    # Per-tile partial sums -> true-B mean.  Reducing outside the kernel keeps
    # the grid carry-free and is also numerically nicer than one running sum.
    return jnp.sum(partials[:, 0, 0]) / B


def _reference_loss(output1, output2, label, margin=1.0):
    # Pure-JAX reference mirroring the PyTorch forward.
    diff = output1.astype(jnp.float32) - output2.astype(jnp.float32) + _EPS
    dist = jnp.sqrt(jnp.sum(diff * diff, axis=-1, keepdims=True))
    hinge = jnp.maximum(margin - dist, 0.0)
    return jnp.mean((1.0 - label) * dist**2 + label * hinge**2)


if __name__ == "__main__":
    key = jax.random.PRNGKey(0)
    k1, k2, k3, k4, k5, k6 = jax.random.split(key, 6)

    # Small siamese-embedding shapes (single tile path).
    B, D = 8, 32
    output1 = jax.random.normal(k1, (B, D), dtype=jnp.float32)
    output2 = jax.random.normal(k2, (B, D), dtype=jnp.float32)
    label = jax.random.bernoulli(k3, 0.5, (B, 1)).astype(jnp.float32)

    loss = contrastive_loss(output1, output2, label, margin=1.0)
    jax.block_until_ready(loss)
    ref = _reference_loss(output1, output2, label, margin=1.0)
    assert jnp.allclose(loss, ref, rtol=1e-5, atol=1e-5), (loss, ref)

    # Multi-tile path with a partial last tile (exercises the parallel grid,
    # per-tile partial-sum outputs, and the padded-row masking).
    B2, D2 = 40, 32
    o1 = jax.random.normal(k4, (B2, D2), dtype=jnp.float32)
    o2 = jax.random.normal(k5, (B2, D2), dtype=jnp.float32)
    lb = jax.random.bernoulli(k6, 0.5, (B2, 1)).astype(jnp.float32)
    loss2 = contrastive_loss(o1, o2, lb, margin=1.0, tile_b=16)
    jax.block_until_ready(loss2)
    ref2 = _reference_loss(o1, o2, lb, margin=1.0)
    assert jnp.allclose(loss2, ref2, rtol=1e-5, atol=1e-5), (loss2, ref2)

    # bf16 input path (bytes move as bf16; math in f32 inside VMEM).
    loss3 = contrastive_loss(o1.astype(jnp.bfloat16), o2.astype(jnp.bfloat16),
                             lb, margin=1.0, tile_b=16)
    jax.block_until_ready(loss3)
    assert jnp.allclose(loss3, ref2, rtol=2e-2, atol=2e-2), (loss3, ref2)

    print("KERNEL_OK")
</pallas_src>

<mosaic_0001>
module attributes {stable_mosaic.version = 11 : i64} {
  func.func @_contrastive_loss_kernel(%arg0: i32, %arg1: memref<8x32xf32, #tpu.memory_space<vmem>>, %arg2: memref<8x32xf32, #tpu.memory_space<vmem>>, %arg3: memref<8x1xf32, #tpu.memory_space<vmem>>, %arg4: memref<1x8x128xf32, #tpu.memory_space<vmem>>) attributes {dimension_semantics = [#tpu.dimension_semantics<parallel>], iteration_bounds = array<i64: 1>, scalar_prefetch = 0 : i64, scratch_operands = 0 : i64, tpu.core_type = #tpu.core_type<tc>, window_params = [{transform_indices = @transform_0, window_bounds = array<i64: 8, 32>}, {transform_indices = @transform_1, window_bounds = array<i64: 8, 32>}, {transform_indices = @transform_2, window_bounds = array<i64: 8, 1>}, {transform_indices = @transform_3, window_bounds = array<i64: 1, 8, 128>}]} {
    %c0 = arith.constant 0 : index
    %c0_0 = arith.constant 0 : index
    %0 = vector.load %arg1[%c0, %c0_0] : memref<8x32xf32, #tpu.memory_space<vmem>>, vector<8x32xf32>
    %c0_1 = arith.constant 0 : index
    %c0_2 = arith.constant 0 : index
    %1 = vector.load %arg2[%c0_1, %c0_2] : memref<8x32xf32, #tpu.memory_space<vmem>>, vector<8x32xf32>
    %c0_3 = arith.constant 0 : index
    %c0_4 = arith.constant 0 : index
    %2 = vector.load %arg3[%c0_3, %c0_4] : memref<8x1xf32, #tpu.memory_space<vmem>>, vector<8x1xf32>
    %3 = arith.subf %0, %1 : vector<8x32xf32>
    %cst = arith.constant 9.99999997E-7 : f32
    %4 = vector.broadcast %cst : f32 to vector<8x32xf32>
    %5 = arith.addf %3, %4 : vector<8x32xf32>
    %6 = arith.mulf %5, %5 : vector<8x32xf32>
    %cst_5 = arith.constant dense<0.000000e+00> : vector<8xf32>
    %7 = vector.multi_reduction <add>, %6, %cst_5 [1] : vector<8x32xf32> to vector<8xf32>
    %8 = vector.shape_cast %7 : vector<8xf32> to vector<8x1xf32>
    %9 = math.sqrt %8 : vector<8x1xf32>
    %cst_6 = arith.constant 1.000000e+00 : f32
    %10 = vector.broadcast %cst_6 : f32 to vector<8x1xf32>
    %11 = arith.subf %10, %9 : vector<8x1xf32>
    %cst_7 = arith.constant 0.000000e+00 : f32
    %12 = vector.broadcast %cst_7 : f32 to vector<8x1xf32>
    %13 = arith.maximumf %11, %12 : vector<8x1xf32>
    %14 = arith.mulf %13, %13 : vector<8x1xf32>
    %15 = arith.subf %14, %8 : vector<8x1xf32>
    %16 = arith.mulf %2, %15 : vector<8x1xf32>
    %17 = arith.addf %8, %16 : vector<8x1xf32>
    %18 = vector.shape_cast %17 : vector<8x1xf32> to vector<1x8x1xf32>
    %cst_8 = arith.constant dense<0.000000e+00> : vector<1xf32>
    %19 = vector.multi_reduction <add>, %18, %cst_8 [1, 2] : vector<1x8x1xf32> to vector<1xf32>
    %20 = vector.shape_cast %19 : vector<1xf32> to vector<1x1x1xf32>
    %21 = vector.extract %20[0, 0, 0] : f32 from vector<1x1x1xf32>
    %22 = vector.broadcast %21 : f32 to vector<1x8x128xf32>
    %c0_9 = arith.constant 0 : index
    %c0_10 = arith.constant 0 : index
    %c0_11 = arith.constant 0 : index
    %23 = vector.load %arg4[%c0_9, %c0_10, %c0_11] : memref<1x8x128xf32, #tpu.memory_space<vmem>>, vector<1x8x128xf32>
    tpu.vector_store %arg4[%c0_9, %c0_10, %c0_11], %22 {strides = array<i32>} : memref<1x8x128xf32, #tpu.memory_space<vmem>>, vector<1x8x128xf32>,
    return
  }
  func.func @transform_0(%arg0: i32) -> (i32, i32) {
    %c0_i32 = arith.constant 0 : i32
    %c0_i32_0 = arith.constant 0 : i32
    return %arg0, %c0_i32 : i32, i32
  }
  func.func @transform_1(%arg0: i32) -> (i32, i32) {
    %c0_i32 = arith.constant 0 : i32
    %c0_i32_0 = arith.constant 0 : i32
    return %arg0, %c0_i32 : i32, i32
  }
  func.func @transform_2(%arg0: i32) -> (i32, i32) {
    %c0_i32 = arith.constant 0 : i32
    %c0_i32_0 = arith.constant 0 : i32
    return %arg0, %c0_i32 : i32, i32
  }
  func.func @transform_3(%arg0: i32) -> (i32, i32, i32) {
    %c0_i32 = arith.constant 0 : i32
    %c0_i32_0 = arith.constant 0 : i32
    %c0_i32_1 = arith.constant 0 : i32
    return %arg0, %c0_i32, %c0_i32_0 : i32, i32, i32
  }
}

</mosaic_0001>

<llo_original>
// kernel: tpu_custom_call.1
$region0: #{tpu_custom_call.1}
  #allocation0 [shape = 'u32[]', space=smem, size = 0x4, offset = 0x4, fixed_abs, tag = 'smem constant byte address 0x4 - core index']
  #allocation1 [shape = 'u32[144,128]{1,0:T(1,128)}', space=vmem, size = 0x12000, scoped, tag = 'internal scratch']
  %s0 = inlined_call_operand.vmem [shape: f32[8,32], index: 0, kind: input, shape index: {}]
  %s1 = inlined_call_operand.hbm [shape: f32[8,32], index: 1, kind: input, shape index: {}]
  %s2 = inlined_call_operand.vmem [shape: f32[8,1], index: 2, kind: input, shape index: {}]
  %s3 = inlined_call_operand.hbm [shape: f32[1,8,128], index: 3, kind: output, shape index: {}]
  %s4 = sld [smem:[#allocation0]]
  $region26: #{tpu_custom_call.1} parent=0
    _
  %s6 = ssub.s32 1, %s4
  %s7 = scalar_select 0, %s6, %s4
  $region1: #{tpu_custom_call.1} parent=0
    #allocation2 [shape = 'u8[4096]{0}', space=vmem, size = 0x1000, scoped, tag = 'input window, operand 1, single buffered']
    #allocation3 [shape = 's32[1]{0}', space=sflag, size = 0x4, scoped, tag = 'scoped memory for tpu_custom_call.1']
    #allocation4 [shape = 's32[1]{0}', space=sflag, size = 0x4, scoped, tag = 'scoped memory for tpu_custom_call.1']
    #allocation5 [shape = 'u8[4096]{0}', space=vmem, size = 0x1000, scoped, tag = 'output window, operand 0, single buffered']
    %8 = vsyncpa [#allocation3], 0
    %9 = vsyncpa [#allocation4], 0
    // Predicated region
    $region2: #{tpu_custom_call.1} parent=1 // pred_check
      _
    $region3: #{tpu_custom_call.1} parent=1 // pred_check_branch
      %11 = sbr.rel (0) target = $region5
    $region4: #{tpu_custom_call.1} parent=1 // pred_region
      _
    $region5: #{tpu_custom_call.1} parent=1 // pred_fallthru
      _
    // Predicated region
    $region6: #{tpu_custom_call.1} parent=1 // pred_check
      _
    $region7: #{tpu_custom_call.1} parent=1 // pred_check_branch
      %13 = sbr.rel (0) target = $region9
    $region8: #{tpu_custom_call.1} parent=1 // pred_region
      %s15 = ssub.s32 128, 128
      %16 = vsyncadd [#allocation3], %s15
      %s18 = sshll.u32 [#allocation2], 4
      %s19 = int_to_ptr.vmem [resolvable:$true] %s18
      %21 = dma.hbm_to_vmem [thread:$0]  %s1, 128, %s19, [#allocation3]
    $region9: #{tpu_custom_call.1} parent=1 // pred_fallthru
      _
    // Predicated region
    $region10: #{tpu_custom_call.1} parent=1 // pred_check
      _
    $region11: #{tpu_custom_call.1} parent=1 // pred_check_branch
      %23 = sbr.rel (0) target = $region13
    $region12: #{tpu_custom_call.1} parent=1 // pred_region
      _
    $region13: #{tpu_custom_call.1} parent=1 // pred_fallthru
      _
    // Predicated region
    $region14: #{tpu_custom_call.1} parent=1 // pred_check
      _
    $region15: #{tpu_custom_call.1} parent=1 // pred_check_branch
      %25 = sbr.rel (0) target = $region17
    $region16: #{tpu_custom_call.1} parent=1 // pred_region
      %26 = dma.done [#allocation3], 128
    $region17: #{tpu_custom_call.1} parent=1 // pred_fallthru
      _
    %v27 = vld [vmem:[%s0] sm:$0xff]
    %v28 = vld [vmem:[#allocation2] sm:$0xff]
    %v29 = vld [vmem:[%s2] sm:$0xff]
    %v30 = vsub.f32 %v27, %v28
    %v31 = vadd.f32 %v30, 1e-06
    %v32 = vmul.f32 %v31, %v31
    %vm33 = vcmask 261120
    %v34 = vsel %vm33, %v32, 0.0
    %35 = vadd.xlane.f32.xlu0 %v34
    %v36 = vpop.xlane.xlu0 %35
    %v37 = vrsqrt.pop %v36
    %v38 = vmul.f32 %v36, %v37
    %vm39 = vcmp.eq.f32.partialorder %v36, inf
    %v40 = vsel %vm39, %v36, %v38
    %vm41 = vcmp.eq.f32.partialorder %v36, 0.0
    %v42 = vand.u32 %v36, 2147483648
    %v43 = vsel %vm41, %v42, %v40
    %v44 = vsub.f32 1.0, %v43
    %v45 = vmax.f32 %v44, 0.0
    %v46 = vmul.f32 %v45, %v45
    %v47 = vsub.f32 %v46, %v36
    %v48 = vmul.f32 %v29, %v47
    %v49 = vadd.f32 %v36, %v48
    %vm50 = vcmask 7168
    %v51 = vsel %vm50, %v49, 0.0
    %52 = vadd.xlane.f32.xlu0 %v51
    %v53 = vpop.xlane.xlu0 %52
    %v54 = vrot.slane %v53, 4
    %v55 = vadd.f32 %v53, %v54
    %v56 = vrot.slane %v55, 2
    %v57 = vadd.f32 %v55, %v56
    %v58 = vrot.slane %v57, 1
    %v59 = vadd.f32 %v57, %v58
    %s60 = vtos %v59
    %v61 = vstv %s60
    %62 = vst [vmem:[#allocation5] sm:$0xff] %v61
    // Predicated region
    $region18: #{tpu_custom_call.1} parent=1 // pred_check
      _
    $region19: #{tpu_custom_call.1} parent=1 // pred_check_branch
      %64 = sbr.rel (0) target = $region21
    $region20: #{tpu_custom_call.1} parent=1 // pred_region
      %s66 = ssub.s32 128, 128
      %67 = vsyncadd [#allocation4], %s66
      %s69 = sshll.u32 [#allocation5], 4
      %s70 = int_to_ptr.vmem [resolvable:$true] %s69
      %72 = dma.vmem_to_hbm [thread:$0]  %s70, 128, %s3, [#allocation4]
    $region21: #{tpu_custom_call.1} parent=1 // pred_fallthru
      _
    // Predicated region
    $region22: #{tpu_custom_call.1} parent=1 // pred_check
      _
    $region23: #{tpu_custom_call.1} parent=1 // pred_check_branch
      %74 = sbr.rel (0) target = $region25
    $region24: #{tpu_custom_call.1} parent=1 // pred_region
      %75 = dma.done [#allocation4], 128
    $region25: #{tpu_custom_call.1} parent=1 // pred_fallthru
      _
    %76 = vsyncpa [#allocation3], 1
    %77 = vsyncpa [#allocation4], 1

</llo_original>
